<compile_context>
chip_gen: v7x
topology: tpu7x:2x2x1
jax: 0.10.0
libtpu: 0.0.40
codegen_flags: <defaults>
</compile_context>

<pallas_src>
import functools
import math

import jax
import jax.numpy as jnp
from jax.experimental import pallas as pl
from jax.experimental.pallas import tpu as pltpu


def _fourier_kernel(x_ref, b_ref, o_ref, *, d_pad):
    # x_ref: (tm, input_dim) ; b_ref: (input_dim, d_pad) ; o_ref: (tm, 2*d_pad)
    proj = jnp.dot(
        x_ref[...],
        b_ref[...],
        preferred_element_type=jnp.float32,
        precision=jax.lax.Precision.HIGHEST,
    )
    o_ref[:, :d_pad] = jnp.cos(proj).astype(o_ref.dtype)
    o_ref[:, d_pad:] = jnp.sin(proj).astype(o_ref.dtype)


def _choose_row_tile(M, target):
    """Pick (tm, M_pad): prefer exact tiling (no pad / no post-slice) and
    keep the grid >= 2 steps so both v7x TensorCores get work."""
    M8 = -(-M // 8) * 8                      # sublane-aligned row count
    cap = max(8, min(int(target), M8))
    cap -= cap % 8
    if M8 >= 16:                             # keep >= 2 grid steps
        cap = max(8, min(cap, (M8 // 2) // 8 * 8))
    if M % 8 == 0:
        tm = cap
        while tm > 8 and M % tm != 0:
            tm -= 8
        # Accept exact tiling unless it forced a pathologically small tile.
        if M % tm == 0 and (tm >= 128 or tm == cap or M <= 1024):
            return tm, M
    # Fallback: pad rows up to a multiple of the capped tile (post-slice).
    tm = cap
    M_pad = -(-M8 // tm) * tm
    return tm, M_pad


def fourier_features(x, B, *, tile_m=1024, out_dtype=None):
    """x: (..., input_dim), B: (input_dim, d) -> (..., 2*d) = [cos(xB), sin(xB)]."""
    input_dim, d = B.shape
    assert x.shape[-1] == input_dim
    out_dtype = jnp.dtype(out_dtype) if out_dtype is not None else x.dtype
    itemsize = out_dtype.itemsize

    lead_shape = x.shape[:-1]
    M = math.prod(lead_shape) if lead_shape else 1
    x2 = x.reshape(M, input_dim)

    # Lane-dense output stores: pad the projection width to a multiple of 128.
    d_pad = max(128, -(-d // 128) * 128)
    if d_pad != d:
        B = jnp.pad(B, ((0, 0), (0, d_pad - d)))

    tm, M_pad = _choose_row_tile(M, tile_m)
    if M_pad != M:
        x2 = jnp.pad(x2, ((0, M_pad - M), (0, 0)))

    grid = (M_pad // tm,)

    # Compiler params: parallel grid axis (megacore); raise scoped VMEM only
    # if the double-buffered tiles could exceed v5e's 16 MiB default.
    vmem_est = 2 * (tm * input_dim * 4 + input_dim * d_pad * 4
                    + tm * 2 * d_pad * itemsize)
    cparams = {"dimension_semantics": ("parallel",)}
    if vmem_est > 12 * 1024 * 1024:
        cparams["vmem_limit_bytes"] = min(vmem_est + (4 << 20), 64 << 20)

    cost = pl.CostEstimate(
        flops=2 * M_pad * input_dim * d_pad,
        transcendentals=2 * M_pad * d_pad,
        bytes_accessed=(M_pad * input_dim * 4
                        + input_dim * d_pad * 4
                        + M_pad * 2 * d_pad * itemsize),
    )

    out = pl.pallas_call(
        functools.partial(_fourier_kernel, d_pad=d_pad),
        out_shape=jax.ShapeDtypeStruct((M_pad, 2 * d_pad), out_dtype),
        grid_spec=pltpu.PrefetchScalarGridSpec(
            num_scalar_prefetch=0,
            grid=grid,
            in_specs=[
                pl.BlockSpec((tm, input_dim), lambda i: (i, 0)),
                pl.BlockSpec((input_dim, d_pad), lambda i: (0, 0)),  # resident
            ],
            out_specs=pl.BlockSpec((tm, 2 * d_pad), lambda i: (i, 0)),
        ),
        compiler_params=pltpu.CompilerParams(**cparams),
        cost_estimate=cost,
    )(x2, B)

    if d_pad != d:
        out = jnp.concatenate([out[:, :d], out[:, d_pad:d_pad + d]], axis=-1)
    if M_pad != M:
        out = out[:M]
    return out.reshape(*lead_shape, 2 * d)


def make_fourier_B(key, input_dim, fourier_embedding_dim=256,
                   fourier_embedding_scale=1.0):
    """Deterministic replacement for the module's randn-initialized B."""
    assert fourier_embedding_dim % 2 == 0
    d = fourier_embedding_dim // 2
    return (2.0 * math.pi * fourier_embedding_scale *
            jax.random.normal(key, (input_dim, d), dtype=jnp.float32))


def _reference(x, B):
    proj = jnp.dot(x, B, precision=jax.lax.Precision.HIGHEST)
    return jnp.concatenate([jnp.cos(proj), jnp.sin(proj)], axis=-1)


if __name__ == "__main__":
    key = jax.random.PRNGKey(0)
    k_x, k_b, k_x2, k_b2 = jax.random.split(key, 4)

    # Case 1: default config (batch=2, seq=8, input_dim=4, embed=256).
    batch, seq, input_dim = 2, 8, 4
    fourier_embedding_dim = 256  # d = 128
    x = jax.random.normal(k_x, (batch, seq, input_dim), dtype=jnp.float32)
    B = make_fourier_B(k_b, input_dim, fourier_embedding_dim, 1.0)
    out = jax.block_until_ready(fourier_features(x, B))
    ref = _reference(x, B)
    assert out.shape == (batch, seq, fourier_embedding_dim), out.shape
    assert jnp.allclose(out, ref, atol=1e-5, rtol=1e-5)

    # Case 2: ragged row count (M not a multiple of 8) exercises the pad path.
    x_r = jax.random.normal(k_x2, (3, 5, input_dim), dtype=jnp.float32)
    out_r = jax.block_until_ready(fourier_features(x_r, B))
    assert out_r.shape == (3, 5, fourier_embedding_dim), out_r.shape
    assert jnp.allclose(out_r, _reference(x_r, B), atol=1e-5, rtol=1e-5)

    # Case 3: d not a multiple of 128 exercises the lane-padding path.
    B_small = make_fourier_B(k_b2, input_dim, 40, 1.0)  # d = 20 -> padded to 128
    out_s = jax.block_until_ready(fourier_features(x, B_small))
    assert out_s.shape == (batch, seq, 40), out_s.shape
    assert jnp.allclose(out_s, _reference(x, B_small), atol=1e-5, rtol=1e-5)

    print("KERNEL_OK")
</pallas_src>

<mosaic_0001>
module attributes {stable_mosaic.version = 11 : i64} {
  func.func @_fourier_kernel(%arg0: i32, %arg1: memref<8x4xf32, #tpu.memory_space<vmem>>, %arg2: memref<4x128xf32, #tpu.memory_space<vmem>>, %arg3: memref<8x256xf32, #tpu.memory_space<vmem>>) attributes {dimension_semantics = [#tpu.dimension_semantics<parallel>], iteration_bounds = array<i64: 2>, scalar_prefetch = 0 : i64, scratch_operands = 0 : i64, tpu.core_type = #tpu.core_type<tc>, window_params = [{transform_indices = @transform_0, window_bounds = array<i64: 8, 4>}, {pipeline_mode = #tpu.pipeline_mode<synchronous>, transform_indices = @transform_1, window_bounds = array<i64: 4, 128>}, {transform_indices = @transform_2, window_bounds = array<i64: 8, 256>}]} {
    %c0 = arith.constant 0 : index
    %c0_0 = arith.constant 0 : index
    %0 = vector.load %arg1[%c0, %c0_0] : memref<8x4xf32, #tpu.memory_space<vmem>>, vector<8x4xf32>
    %c0_1 = arith.constant 0 : index
    %c0_2 = arith.constant 0 : index
    %1 = vector.load %arg2[%c0_1, %c0_2] : memref<4x128xf32, #tpu.memory_space<vmem>>, vector<4x128xf32>
    %cst = arith.constant dense<0.000000e+00> : vector<8x128xf32>
    %2 = tpu.matmul %0, %1, %cst {dimension_numbers = #tpu.dot_dimension_numbers<[1], [0], [0], [1], [0, 0, 1, 1], [], []>, precision = #tpu.contract_precision<fp32>} : vector<8x4xf32>, vector<4x128xf32>, vector<8x128xf32> -> vector<8x128xf32>
    %3 = math.cos %2 : vector<8x128xf32>
    %c0_3 = arith.constant 0 : index
    %c0_4 = arith.constant 0 : index
    %4 = vector.load %arg3[%c0_3, %c0_4] : memref<8x256xf32, #tpu.memory_space<vmem>>, vector<8x128xf32>
    tpu.vector_store %arg3[%c0_3, %c0_4], %3 {strides = array<i32>} : memref<8x256xf32, #tpu.memory_space<vmem>>, vector<8x128xf32>,
    %5 = math.sin %2 : vector<8x128xf32>
    %c0_5 = arith.constant 0 : index
    %c128 = arith.constant 128 : index
    %6 = vector.load %arg3[%c0_5, %c128] : memref<8x256xf32, #tpu.memory_space<vmem>>, vector<8x128xf32>
    tpu.vector_store %arg3[%c0_5, %c128], %5 {strides = array<i32>} : memref<8x256xf32, #tpu.memory_space<vmem>>, vector<8x128xf32>,
    return
  }
  func.func @transform_0(%arg0: i32) -> (i32, i32) {
    %c0_i32 = arith.constant 0 : i32
    %c0_i32_0 = arith.constant 0 : i32
    return %arg0, %c0_i32 : i32, i32
  }
  func.func @transform_1(%arg0: i32) -> (i32, i32) {
    %c0_i32 = arith.constant 0 : i32
    %c0_i32_0 = arith.constant 0 : i32
    %c0_i32_1 = arith.constant 0 : i32
    return %c0_i32, %c0_i32_0 : i32, i32
  }
  func.func @transform_2(%arg0: i32) -> (i32, i32) {
    %c0_i32 = arith.constant 0 : i32
    %c0_i32_0 = arith.constant 0 : i32
    return %arg0, %c0_i32 : i32, i32
  }
}

</mosaic_0001>

<llo_original>
// kernel: tpu_custom_call.1
$region0: #{tpu_custom_call.1}
  #allocation0 [shape = 'u32[]', space=smem, size = 0x4, offset = 0x4, fixed_abs, tag = 'smem constant byte address 0x4 - core index']
  #allocation1 [shape = 'u32[144,128]{1,0:T(1,128)}', space=vmem, size = 0x12000, scoped, tag = 'internal scratch']
  %s0 = inlined_call_operand.vmem [shape: f32[16,4], index: 0, kind: input, shape index: {}]
  %s1 = inlined_call_operand.vmem [shape: f32[4,128], index: 1, kind: input, shape index: {}]
  %s2 = inlined_call_operand.hbm [shape: f32[16,256], index: 2, kind: output, shape index: {}]
  %s3 = sld [smem:[#allocation0]]
  $region41: #{tpu_custom_call.1} parent=0
    _
  %s5 = ssub.s32 1, %s3
  %s6 = scalar_select 0, %s5, %s3
  $region1: #{tpu_custom_call.1} parent=0
    #allocation2 [shape = 'u8[16384]{0}', space=vmem, size = 0x4000, scoped, tag = 'output window, operand 0']
    #allocation3 [shape = 's32[2]{0}', space=sflag, size = 0x8, scoped, tag = 'scoped memory for tpu_custom_call.1']
    %7 = vsyncpa [#allocation3], 0
    %s8 = scalar_lea.sflag [#allocation3], 1
    %9 = vsyncpa %s8, 0
    loop: start=0, step=1, limit=4
    $region2: #{tpu_custom_call.1} parent=1 // loop_pre_header
      _
    $region3: #{tpu_custom_call.1} parent=1 // loop_header
      %s11 = sphi 0, %s15
      %p12 = scmp.ge.s32.totalorder %s11, 4
      %s21 = sphi 0, %s23
      %s24 = sphi 0, %s21
      %s25 = sphi 0, %s24
      %s41 = sphi 0, %s25
      %s45 = sphi 0, %s45
      %s47 = sphi 0, %s45
      %s48 = sphi 0, %s47
      %s62 = sphi 0, %s48
      %s68 = sphi 0, %s70
      %s71 = sphi 0, %s68
      %s72 = sphi 0, %s71
      %s88 = sphi 0, %s72
    $region4: #{tpu_custom_call.1} parent=1 // loop_header_branch
      %14 = sbr.rel (%p12) target = $region8
    $region5: #{tpu_custom_call.1} parent=1 // loop_body
      %s16 = ssub.s32 %s11, 1
      %s17 = ssub.s32 %s11, 2
      %s18 = sadd.s32 %s11, 1
      %s19 = ssub.s32 %s11, %s18
      %p20 = scmp.eq.s32.totalorder %s19, 0
      %s22 = sadd.s32 %s21, 1
      %s23 = scalar_select %p20, %s21, %s22
      %p26 = pneg %p20
      %p27 = scmp.eq.s32.totalorder %s11, 1
      %p28 = por %p26, %p27
      %p29 = scmp.ne.s32.totalorder %s21, %s24
      %p30 = scmp.eq.s32.totalorder %s11, 0
      %p31 = por %p29, %p30
      %p32 = scmp.ne.s32.totalorder %s21, %s24
      %p33 = scmp.eq.s32.totalorder %s16, 1
      %p34 = por %p32, %p33
      %p35 = scmp.ne.s32.totalorder %s24, %s25
      %p36 = scmp.eq.s32.totalorder %s16, 0
      %p37 = por %p35, %p36
      %p38 = scmp.ne.s32.totalorder %s24, %s25
      %p39 = scmp.eq.s32.totalorder %s17, 1
      %p40 = por %p38, %p39
      %p42 = scmp.ne.s32.totalorder %s25, %s41
      %p43 = scmp.eq.s32.totalorder %s17, 0
      %p44 = por %p42, %p43
      %s46 = sadd.s32 %s45, 1
      %p49 = scmp.eq.s32.totalorder %s11, 1
      %p50 = scmp.ne.s32.totalorder %s45, %s47
      %p51 = scmp.eq.s32.totalorder %s11, 0
      %p52 = por %p50, %p51
      %p53 = scmp.ne.s32.totalorder %s45, %s47
      %p54 = scmp.eq.s32.totalorder %s16, 1
      %p55 = por %p53, %p54
      %p56 = scmp.ne.s32.totalorder %s47, %s48
      %p57 = scmp.eq.s32.totalorder %s16, 0
      %p58 = por %p56, %p57
      %p59 = scmp.ne.s32.totalorder %s47, %s48
      %p60 = scmp.eq.s32.totalorder %s17, 1
      %p61 = por %p59, %p60
      %p63 = scmp.ne.s32.totalorder %s48, %s62
      %p64 = scmp.eq.s32.totalorder %s17, 0
      %p65 = por %p63, %p64
      %s66 = ssub.s32 %s11, %s18
      %p67 = scmp.eq.s32.totalorder %s66, 0
      %s69 = sadd.s32 %s68, 1
      %s70 = scalar_select %p67, %s68, %s69
      %p73 = pneg %p67
      %p74 = scmp.eq.s32.totalorder %s11, 1
      %p75 = por %p73, %p74
      %p76 = scmp.ne.s32.totalorder %s68, %s71
      %p77 = scmp.eq.s32.totalorder %s11, 0
      %p78 = por %p76, %p77
      %p79 = scmp.ne.s32.totalorder %s68, %s71
      %p80 = scmp.eq.s32.totalorder %s16, 1
      %p81 = por %p79, %p80
      %p82 = scmp.ne.s32.totalorder %s71, %s72
      %p83 = scmp.eq.s32.totalorder %s16, 0
      %p84 = por %p82, %p83
      %p85 = scmp.ne.s32.totalorder %s71, %s72
      %p86 = scmp.eq.s32.totalorder %s17, 1
      %p87 = por %p85, %p86
      %p89 = scmp.ne.s32.totalorder %s72, %s88
      %p90 = scmp.eq.s32.totalorder %s17, 0
      %p91 = por %p89, %p90
      %p92 = scmp.le.s32.totalorder 1, %s11
      %p93 = scmp.lt.s32.totalorder %s11, 3
      %p94 = pnand %p92, %p93
      %p95 = pneg %p94
      // Predicated region
      $region9: #{tpu_custom_call.1} parent=5 // pred_check
        _
      $region10: #{tpu_custom_call.1} parent=5 // pred_check_branch
        %97 = sbr.rel (%p94) target = $region12
      $region11: #{tpu_custom_call.1} parent=5 // pred_region
        %s98 = ssub.s32 %s11, 1
        // Predicated region
        $region13: #{tpu_custom_call.1} parent=11 // pred_check
          %p99 = pneg %p58
        $region14: #{tpu_custom_call.1} parent=11 // pred_check_branch
          %101 = sbr.rel (%p99) target = $region16
        $region15: #{tpu_custom_call.1} parent=11 // pred_region
          _
        $region16: #{tpu_custom_call.1} parent=11 // pred_fallthru
          _
      $region12: #{tpu_custom_call.1} parent=5 // pred_fallthru
        _
      %p102 = scmp.lt.s32.totalorder %s11, 2
      // Predicated region
      $region17: #{tpu_custom_call.1} parent=5 // pred_check
        %p103 = pneg %p102
      $region18: #{tpu_custom_call.1} parent=5 // pred_check_branch
        %105 = sbr.rel (%p103) target = $region20
      $region19: #{tpu_custom_call.1} parent=5 // pred_region
        // Predicated region
        $region21: #{tpu_custom_call.1} parent=19 // pred_check
          %p106 = pneg %p31
        $region22: #{tpu_custom_call.1} parent=19 // pred_check_branch
          %108 = sbr.rel (%p106) target = $region24
        $region23: #{tpu_custom_call.1} parent=19 // pred_region
          %p109 = scmp.lt.s32.totalorder %s11, 1
          %s110 = scalar_select %p109, %s11, 1
          %s111 = smul.addr %s110, 8
          %s112 = scalar_lea.vmem %s0, %s111
        $region24: #{tpu_custom_call.1} parent=19 // pred_fallthru
          _
      $region20: #{tpu_custom_call.1} parent=5 // pred_fallthru
        _
      %p113 = scmp.le.s32.totalorder 1, %s11
      %p114 = scmp.lt.s32.totalorder %s11, 3
      %p115 = pnand %p113, %p114
      %p116 = pneg %p115
      // Predicated region
      $region25: #{tpu_custom_call.1} parent=5 // pred_check
        _
      $region26: #{tpu_custom_call.1} parent=5 // pred_check_branch
        %118 = sbr.rel (%p115) target = $region28
      $region27: #{tpu_custom_call.1} parent=5 // pred_region
        %s119 = ssub.s32 %s11, 1
        %p120 = scmp.lt.s32.totalorder %s16, 1
        %s121 = scalar_select %p120, %s16, 1
        %s122 = smul.addr %s121, 8
        %s123 = scalar_lea.vmem %s0, %s122
        %p124 = pneg %p37
        %p125 = pneg %p34
        %p126 = pneg %p58
        %p127 = pneg %p55
        %p128 = pneg %p84
        %p129 = pneg %p81
        %s130 = sand.u32 %s71, 1
        %s131 = scalar_lea.sflag [#allocation3], %s130
        %s132 = sand.u32 %s71, 1
        %s133 = smul.addr %s132, 16
        %s134 = scalar_lea.vmem [#allocation2], %s133
        %p135 = scmp.lt.s32.totalorder %s16, 1
        %s136 = scalar_select %p135, %s16, 1
        %s137 = smul.addr %s136, 8
        %s138 = scalar_lea.vmem %s0, %s137
        %v139 = vld [vmem:[%s138] sm:$0xff]
        %v140 = vld [vmem:[%s1] sm:$0xf]
        %vm141 = vcmask 31744
        %v143 = vsel %vm141, %v139, 0
        %vm145 = vcmask 1043456
        %v147 = vsel %vm145, %v140, 0
        %149 = vmatprep.subr.mxu0 0.0
        %v150 = vand.u32 %v147, 4294901760
        %151 = vmatpush1.msra.mxu0 %v150
        %152 = vmatprep.subr.mxu0 0.0
        %153 = vmatpush1.msra.mxu0 0.0
        %154 = vmatprep.subr.mxu0 0.0
        %155 = vmatpush1.msra.mxu0 0.0
        %156 = vmatprep.subr.mxu0 0.0
        %157 = vmatpush1.msra.mxu0 0.0
        %158 = vmatprep.subr.mxu0 0.0
        %159 = vmatpush1.msra.mxu0 0.0
        %160 = vmatprep.subr.mxu0 0.0
        %161 = vmatpush1.msra.mxu0 0.0
        %162 = vmatprep.subr.mxu0 0.0
        %163 = vmatpush1.msra.mxu0 0.0
        %164 = vmatprep.subr.mxu0 0.0
        %165 = vmatpush1.msra.mxu0 0.0
        %166 = vmatprep.subr.mxu0 0.0
        %167 = vmatpush1.msra.mxu0 0.0
        %168 = vmatprep.subr.mxu0 0.0
        %169 = vmatpush1.msra.mxu0 0.0
        %170 = vmatprep.subr.mxu0 0.0
        %171 = vmatpush1.msra.mxu0 0.0
        %172 = vmatprep.subr.mxu0 0.0
        %173 = vmatpush1.msra.mxu0 0.0
        %174 = vmatprep.subr.mxu0 0.0
        %175 = vmatpush1.msra.mxu0 0.0
        %176 = vmatprep.subr.mxu0 0.0
        %177 = vmatpush1.msra.mxu0 0.0
        %178 = vmatprep.subr.mxu0 0.0
        %179 = vmatpush1.msra.mxu0 0.0
        %180 = vmatprep.subr.mxu0 0.0
        %181 = vmatpush1.msra.mxu0 0.0
        %182 = vmatprep.subr.mxu0 0.0
        %183 = vmatpush1.msra.mxu0 0.0
        %184 = vmatprep.subr.mxu0 0.0
        %185 = vmatpush1.msra.mxu0 0.0
        %186 = vmatprep.subr.mxu0 0.0
        %187 = vmatpush1.msra.mxu0 0.0
        %188 = vmatprep.subr.mxu0 0.0
        %189 = vmatpush1.msra.mxu0 0.0
        %190 = vmatprep.subr.mxu0 0.0
        %191 = vmatpush1.msra.mxu0 0.0
        %192 = vmatprep.subr.mxu0 0.0
        %193 = vmatpush1.msra.mxu0 0.0
        %194 = vmatprep.subr.mxu0 0.0
        %195 = vmatpush1.msra.mxu0 0.0
        %196 = vmatprep.subr.mxu0 0.0
        %197 = vmatpush1.msra.mxu0 0.0
        %198 = vmatprep.subr.mxu0 0.0
        %199 = vmatpush1.msra.mxu0 0.0
        %200 = vmatprep.subr.mxu0 0.0
        %201 = vmatpush1.msra.mxu0 0.0
        %202 = vmatprep.subr.mxu0 0.0
        %203 = vmatpush1.msra.mxu0 0.0
        %204 = vmatprep.subr.mxu0 0.0
        %205 = vmatpush1.msra.mxu0 0.0
        %206 = vmatprep.subr.mxu0 0.0
        %207 = vmatpush1.msra.mxu0 0.0
        %208 = vmatprep.subr.mxu0 0.0
        %209 = vmatpush1.msra.mxu0 0.0
        %210 = vmatprep.subr.mxu0 0.0
        %211 = vmatpush1.msra.mxu0 0.0
        %212 = vmatprep.subr.mxu0 0.0
        %213 = vmatpush1.msra.mxu0 0.0
        %214 = vmatprep.mubr.f32.mxu0 0.0
        %v215 = vand.u32 %v143, 4294901760
        %v216 = vsub.f32 %v143, %v215
        %v217 = vand.u32 %v216, 4294901760
        %v218 = vsub.f32 %v216, %v217
        %v219 = vand.u32 %v218, 4294901760
        %220 = vmatmul.mubr.f32.gmra.mrb[0].mxu0 %v219
        %v221 = vpop.f32.mrb[0].mxu0
        %v222 = vadd.f32 0.0, %v221
        %v223 = vpop.f32.mrb[0].mxu0
        %224 = vdwg.mxu0
        %225 = vmatprep.subr.mxu0 0.0
        %v226 = vand.u32 %v147, 4294901760
        %v227 = vsub.f32 %v147, %v226
        %v228 = vand.u32 %v227, 4294901760
        %v229 = vsub.f32 %v227, %v228
        %v230 = vand.u32 %v229, 4294901760
        %231 = vmatpush1.msra.mxu0 %v230
        %232 = vmatprep.subr.mxu0 0.0
        %233 = vmatpush1.msra.mxu0 0.0
        %234 = vmatprep.subr.mxu0 0.0
        %235 = vmatpush1.msra.mxu0 0.0
        %236 = vmatprep.subr.mxu0 0.0
        %237 = vmatpush1.msra.mxu0 0.0
        %238 = vmatprep.subr.mxu0 0.0
        %239 = vmatpush1.msra.mxu0 0.0
        %240 = vmatprep.subr.mxu0 0.0
        %241 = vmatpush1.msra.mxu0 0.0
        %242 = vmatprep.subr.mxu0 0.0
        %243 = vmatpush1.msra.mxu0 0.0
        %244 = vmatprep.subr.mxu0 0.0
        %245 = vmatpush1.msra.mxu0 0.0
        %246 = vmatprep.subr.mxu0 0.0
        %247 = vmatpush1.msra.mxu0 0.0
        %248 = vmatprep.subr.mxu0 0.0
        %249 = vmatpush1.msra.mxu0 0.0
        %250 = vmatprep.subr.mxu0 0.0
        %251 = vmatpush1.msra.mxu0 0.0
        %252 = vmatprep.subr.mxu0 0.0
        %253 = vmatpush1.msra.mxu0 0.0
        %254 = vmatprep.subr.mxu0 0.0
        %255 = vmatpush1.msra.mxu0 0.0
        %256 = vmatprep.subr.mxu0 0.0
        %257 = vmatpush1.msra.mxu0 0.0
        %258 = vmatprep.subr.mxu0 0.0
        %259 = vmatpush1.msra.mxu0 0.0
        %260 = vmatprep.subr.mxu0 0.0
        %261 = vmatpush1.msra.mxu0 0.0
        %262 = vmatprep.subr.mxu0 0.0
        %263 = vmatpush1.msra.mxu0 0.0
        %264 = vmatprep.subr.mxu0 0.0
        %265 = vmatpush1.msra.mxu0 0.0
        %266 = vmatprep.subr.mxu0 0.0
        %267 = vmatpush1.msra.mxu0 0.0
        %268 = vmatprep.subr.mxu0 0.0
        %269 = vmatpush1.msra.mxu0 0.0
        %270 = vmatprep.subr.mxu0 0.0
        %271 = vmatpush1.msra.mxu0 0.0
        %272 = vmatprep.subr.mxu0 0.0
        %273 = vmatpush1.msra.mxu0 0.0
        %274 = vmatprep.subr.mxu0 0.0
        %275 = vmatpush1.msra.mxu0 0.0
        %276 = vmatprep.subr.mxu0 0.0
        %277 = vmatpush1.msra.mxu0 0.0
        %278 = vmatprep.subr.mxu0 0.0
        %279 = vmatpush1.msra.mxu0 0.0
        %280 = vmatprep.subr.mxu0 0.0
        %281 = vmatpush1.msra.mxu0 0.0
        %282 = vmatprep.subr.mxu0 0.0
        %283 = vmatpush1.msra.mxu0 0.0
        %284 = vmatprep.subr.mxu0 0.0
        %285 = vmatpush1.msra.mxu0 0.0
        %286 = vmatprep.subr.mxu0 0.0
        %287 = vmatpush1.msra.mxu0 0.0
        %288 = vmatprep.subr.mxu0 0.0
        %289 = vmatpush1.msra.mxu0 0.0
        %290 = vmatprep.subr.mxu0 0.0
        %291 = vmatpush1.msra.mxu0 0.0
        %292 = vmatprep.subr.mxu0 0.0
        %293 = vmatpush1.msra.mxu0 0.0
        %294 = vmatprep.mubr.f32.mxu0 0.0
        %v295 = vand.u32 %v143, 4294901760
        %296 = vmatmul.mubr.f32.gmra.mrb[0].mxu0 %v295
        %v297 = vpop.f32.mrb[0].mxu0
        %v298 = vadd.f32 %v222, %v297
        %v299 = vpop.f32.mrb[0].mxu0
        %300 = vdwg.mxu0
        %301 = vmatprep.subr.mxu0 0.0
        %v302 = vand.u32 %v147, 4294901760
        %v303 = vsub.f32 %v147, %v302
        %304 = vmatpush1.msra.mxu0 %v303
        %305 = vmatprep.subr.mxu0 0.0
        %306 = vmatpush1.msra.mxu0 0.0
        %307 = vmatprep.subr.mxu0 0.0
        %308 = vmatpush1.msra.mxu0 0.0
        %309 = vmatprep.subr.mxu0 0.0
        %310 = vmatpush1.msra.mxu0 0.0
        %311 = vmatprep.subr.mxu0 0.0
        %312 = vmatpush1.msra.mxu0 0.0
        %313 = vmatprep.subr.mxu0 0.0
        %314 = vmatpush1.msra.mxu0 0.0
        %315 = vmatprep.subr.mxu0 0.0
        %316 = vmatpush1.msra.mxu0 0.0
        %317 = vmatprep.subr.mxu0 0.0
        %318 = vmatpush1.msra.mxu0 0.0
        %319 = vmatprep.subr.mxu0 0.0
        %320 = vmatpush1.msra.mxu0 0.0
        %321 = vmatprep.subr.mxu0 0.0
        %322 = vmatpush1.msra.mxu0 0.0
        %323 = vmatprep.subr.mxu0 0.0
        %324 = vmatpush1.msra.mxu0 0.0
        %325 = vmatprep.subr.mxu0 0.0
        %326 = vmatpush1.msra.mxu0 0.0
        %327 = vmatprep.subr.mxu0 0.0
        %328 = vmatpush1.msra.mxu0 0.0
        %329 = vmatprep.subr.mxu0 0.0
        %330 = vmatpush1.msra.mxu0 0.0
        %331 = vmatprep.subr.mxu0 0.0
        %332 = vmatpush1.msra.mxu0 0.0
        %333 = vmatprep.subr.mxu0 0.0
        %334 = vmatpush1.msra.mxu0 0.0
        %335 = vmatprep.subr.mxu0 0.0
        %336 = vmatpush1.msra.mxu0 0.0
        %337 = vmatprep.subr.mxu0 0.0
        %338 = vmatpush1.msra.mxu0 0.0
        %339 = vmatprep.subr.mxu0 0.0
        %340 = vmatpush1.msra.mxu0 0.0
        %341 = vmatprep.subr.mxu0 0.0
        %342 = vmatpush1.msra.mxu0 0.0
        %343 = vmatprep.subr.mxu0 0.0
        %344 = vmatpush1.msra.mxu0 0.0
        %345 = vmatprep.subr.mxu0 0.0
        %346 = vmatpush1.msra.mxu0 0.0
        %347 = vmatprep.subr.mxu0 0.0
        %348 = vmatpush1.msra.mxu0 0.0
        %349 = vmatprep.subr.mxu0 0.0
        %350 = vmatpush1.msra.mxu0 0.0
        %351 = vmatprep.subr.mxu0 0.0
        %352 = vmatpush1.msra.mxu0 0.0
        %353 = vmatprep.subr.mxu0 0.0
        %354 = vmatpush1.msra.mxu0 0.0
        %355 = vmatprep.subr.mxu0 0.0
        %356 = vmatpush1.msra.mxu0 0.0
        %357 = vmatprep.subr.mxu0 0.0
        %358 = vmatpush1.msra.mxu0 0.0
        %359 = vmatprep.subr.mxu0 0.0
        %360 = vmatpush1.msra.mxu0 0.0
        %361 = vmatprep.subr.mxu0 0.0
        %362 = vmatpush1.msra.mxu0 0.0
        %363 = vmatprep.subr.mxu0 0.0
        %364 = vmatpush1.msra.mxu0 0.0
        %365 = vmatprep.subr.mxu0 0.0
        %366 = vmatpush1.msra.mxu0 0.0
        %367 = vmatprep.mubr.f32.mxu0 0.0
        %v368 = vand.u32 %v143, 4294901760
        %v369 = vsub.f32 %v143, %v368
        %370 = vmatmul.mubr.f32.gmra.mrb[0].mxu0 %v369
        %v371 = vpop.f32.mrb[0].mxu0
        %v372 = vadd.f32 %v298, %v371
        %v373 = vpop.f32.mrb[0].mxu0
        %374 = vdwg.mxu0
        %375 = vmatprep.subr.mxu0 0.0
        %v376 = vand.u32 %v147, 4294901760
        %377 = vmatpush1.msra.mxu0 %v376
        %378 = vmatprep.subr.mxu0 0.0
        %379 = vmatpush1.msra.mxu0 0.0
        %380 = vmatprep.subr.mxu0 0.0
        %381 = vmatpush1.msra.mxu0 0.0
        %382 = vmatprep.subr.mxu0 0.0
        %383 = vmatpush1.msra.mxu0 0.0
        %384 = vmatprep.subr.mxu0 0.0
        %385 = vmatpush1.msra.mxu0 0.0
        %386 = vmatprep.subr.mxu0 0.0
        %387 = vmatpush1.msra.mxu0 0.0
        %388 = vmatprep.subr.mxu0 0.0
        %389 = vmatpush1.msra.mxu0 0.0
        %390 = vmatprep.subr.mxu0 0.0
        %391 = vmatpush1.msra.mxu0 0.0
        %392 = vmatprep.subr.mxu0 0.0
        %393 = vmatpush1.msra.mxu0 0.0
        %394 = vmatprep.subr.mxu0 0.0
        %395 = vmatpush1.msra.mxu0 0.0
        %396 = vmatprep.subr.mxu0 0.0
        %397 = vmatpush1.msra.mxu0 0.0
        %398 = vmatprep.subr.mxu0 0.0
        %399 = vmatpush1.msra.mxu0 0.0
        %400 = vmatprep.subr.mxu0 0.0
        %401 = vmatpush1.msra.mxu0 0.0
        %402 = vmatprep.subr.mxu0 0.0
        %403 = vmatpush1.msra.mxu0 0.0
        %404 = vmatprep.subr.mxu0 0.0
        %405 = vmatpush1.msra.mxu0 0.0
        %406 = vmatprep.subr.mxu0 0.0
        %407 = vmatpush1.msra.mxu0 0.0
        %408 = vmatprep.subr.mxu0 0.0
        %409 = vmatpush1.msra.mxu0 0.0
        %410 = vmatprep.subr.mxu0 0.0
        %411 = vmatpush1.msra.mxu0 0.0
        %412 = vmatprep.subr.mxu0 0.0
        %413 = vmatpush1.msra.mxu0 0.0
        %414 = vmatprep.subr.mxu0 0.0
        %415 = vmatpush1.msra.mxu0 0.0
        %416 = vmatprep.subr.mxu0 0.0
        %417 = vmatpush1.msra.mxu0 0.0
        %418 = vmatprep.subr.mxu0 0.0
        %419 = vmatpush1.msra.mxu0 0.0
        %420 = vmatprep.subr.mxu0 0.0
        %421 = vmatpush1.msra.mxu0 0.0
        %422 = vmatprep.subr.mxu0 0.0
        %423 = vmatpush1.msra.mxu0 0.0
        %424 = vmatprep.subr.mxu0 0.0
        %425 = vmatpush1.msra.mxu0 0.0
        %426 = vmatprep.subr.mxu0 0.0
        %427 = vmatpush1.msra.mxu0 0.0
        %428 = vmatprep.subr.mxu0 0.0
        %429 = vmatpush1.msra.mxu0 0.0
        %430 = vmatprep.subr.mxu0 0.0
        %431 = vmatpush1.msra.mxu0 0.0
        %432 = vmatprep.subr.mxu0 0.0
        %433 = vmatpush1.msra.mxu0 0.0
        %434 = vmatprep.subr.mxu0 0.0
        %435 = vmatpush1.msra.mxu0 0.0
        %436 = vmatprep.subr.mxu0 0.0
        %437 = vmatpush1.msra.mxu0 0.0
        %438 = vmatprep.subr.mxu0 0.0
        %439 = vmatpush1.msra.mxu0 0.0
        %440 = vmatprep.mubr.f32.mxu0 0.0
        %v441 = vand.u32 %v143, 4294901760
        %v442 = vsub.f32 %v143, %v441
        %v443 = vand.u32 %v442, 4294901760
        %444 = vmatmul.mubr.f32.gmra.mrb[0].mxu0 %v443
        %v445 = vpop.f32.mrb[0].mxu0
        %v446 = vadd.f32 %v372, %v445
        %v447 = vpop.f32.mrb[0].mxu0
        %448 = vdwg.mxu0
        %449 = vmatprep.subr.mxu0 0.0
        %v450 = vand.u32 %v147, 4294901760
        %v451 = vsub.f32 %v147, %v450
        %v452 = vand.u32 %v451, 4294901760
        %453 = vmatpush1.msra.mxu0 %v452
        %454 = vmatprep.subr.mxu0 0.0
        %455 = vmatpush1.msra.mxu0 0.0
        %456 = vmatprep.subr.mxu0 0.0
        %457 = vmatpush1.msra.mxu0 0.0
        %458 = vmatprep.subr.mxu0 0.0
        %459 = vmatpush1.msra.mxu0 0.0
        %460 = vmatprep.subr.mxu0 0.0
        %461 = vmatpush1.msra.mxu0 0.0
        %462 = vmatprep.subr.mxu0 0.0
        %463 = vmatpush1.msra.mxu0 0.0
        %464 = vmatprep.subr.mxu0 0.0
        %465 = vmatpush1.msra.mxu0 0.0
        %466 = vmatprep.subr.mxu0 0.0
        %467 = vmatpush1.msra.mxu0 0.0
        %468 = vmatprep.subr.mxu0 0.0
        %469 = vmatpush1.msra.mxu0 0.0
        %470 = vmatprep.subr.mxu0 0.0
        %471 = vmatpush1.msra.mxu0 0.0
        %472 = vmatprep.subr.mxu0 0.0
        %473 = vmatpush1.msra.mxu0 0.0
        %474 = vmatprep.subr.mxu0 0.0
        %475 = vmatpush1.msra.mxu0 0.0
        %476 = vmatprep.subr.mxu0 0.0
        %477 = vmatpush1.msra.mxu0 0.0
        %478 = vmatprep.subr.mxu0 0.0
        %479 = vmatpush1.msra.mxu0 0.0
        %480 = vmatprep.subr.mxu0 0.0
        %481 = vmatpush1.msra.mxu0 0.0
        %482 = vmatprep.subr.mxu0 0.0
        %483 = vmatpush1.msra.mxu0 0.0
        %484 = vmatprep.subr.mxu0 0.0
        %485 = vmatpush1.msra.mxu0 0.0
        %486 = vmatprep.subr.mxu0 0.0
        %487 = vmatpush1.msra.mxu0 0.0
        %488 = vmatprep.subr.mxu0 0.0
        %489 = vmatpush1.msra.mxu0 0.0
        %490 = vmatprep.subr.mxu0 0.0
        %491 = vmatpush1.msra.mxu0 0.0
        %492 = vmatprep.subr.mxu0 0.0
        %493 = vmatpush1.msra.mxu0 0.0
        %494 = vmatprep.subr.mxu0 0.0
        %495 = vmatpush1.msra.mxu0 0.0
        %496 = vmatprep.subr.mxu0 0.0
        %497 = vmatpush1.msra.mxu0 0.0
        %498 = vmatprep.subr.mxu0 0.0
        %499 = vmatpush1.msra.mxu0 0.0
        %500 = vmatprep.subr.mxu0 0.0
        %501 = vmatpush1.msra.mxu0 0.0
        %502 = vmatprep.subr.mxu0 0.0
        %503 = vmatpush1.msra.mxu0 0.0
        %504 = vmatprep.subr.mxu0 0.0
        %505 = vmatpush1.msra.mxu0 0.0
        %506 = vmatprep.subr.mxu0 0.0
        %507 = vmatpush1.msra.mxu0 0.0
        %508 = vmatprep.subr.mxu0 0.0
        %509 = vmatpush1.msra.mxu0 0.0
        %510 = vmatprep.subr.mxu0 0.0
        %511 = vmatpush1.msra.mxu0 0.0
        %512 = vmatprep.subr.mxu0 0.0
        %513 = vmatpush1.msra.mxu0 0.0
        %514 = vmatprep.subr.mxu0 0.0
        %515 = vmatpush1.msra.mxu0 0.0
        %516 = vmatprep.mubr.f32.mxu0 0.0
        %v517 = vand.u32 %v143, 4294901760
        %518 = vmatmul.mubr.f32.gmra.mrb[0].mxu0 %v517
        %v519 = vpop.f32.mrb[0].mxu0
        %v520 = vadd.f32 %v446, %v519
        %v521 = vpop.f32.mrb[0].mxu0
        %522 = vdwg.mxu0
        %523 = vmatprep.subr.mxu0 0.0
        %v524 = vand.u32 %v147, 4294901760
        %525 = vmatpush1.msra.mxu0 %v524
        %526 = vmatprep.subr.mxu0 0.0
        %527 = vmatpush1.msra.mxu0 0.0
        %528 = vmatprep.subr.mxu0 0.0
        %529 = vmatpush1.msra.mxu0 0.0
        %530 = vmatprep.subr.mxu0 0.0
        %531 = vmatpush1.msra.mxu0 0.0
        %532 = vmatprep.subr.mxu0 0.0
        %533 = vmatpush1.msra.mxu0 0.0
        %534 = vmatprep.subr.mxu0 0.0
        %535 = vmatpush1.msra.mxu0 0.0
        %536 = vmatprep.subr.mxu0 0.0
        %537 = vmatpush1.msra.mxu0 0.0
        %538 = vmatprep.subr.mxu0 0.0
        %539 = vmatpush1.msra.mxu0 0.0
        %540 = vmatprep.subr.mxu0 0.0
        %541 = vmatpush1.msra.mxu0 0.0
        %542 = vmatprep.subr.mxu0 0.0
        %543 = vmatpush1.msra.mxu0 0.0
        %544 = vmatprep.subr.mxu0 0.0
        %545 = vmatpush1.msra.mxu0 0.0
        %546 = vmatprep.subr.mxu0 0.0
        %547 = vmatpush1.msra.mxu0 0.0
        %548 = vmatprep.subr.mxu0 0.0
        %549 = vmatpush1.msra.mxu0 0.0
        %550 = vmatprep.subr.mxu0 0.0
        %551 = vmatpush1.msra.mxu0 0.0
        %552 = vmatprep.subr.mxu0 0.0
        %553 = vmatpush1.msra.mxu0 0.0
        %554 = vmatprep.subr.mxu0 0.0
        %555 = vmatpush1.msra.mxu0 0.0
        %556 = vmatprep.subr.mxu0 0.0
        %557 = vmatpush1.msra.mxu0 0.0
        %558 = vmatprep.subr.mxu0 0.0
        %559 = vmatpush1.msra.mxu0 0.0
        %560 = vmatprep.subr.mxu0 0.0
        %561 = vmatpush1.msra.mxu0 0.0
        %562 = vmatprep.subr.mxu0 0.0
        %563 = vmatpush1.msra.mxu0 0.0
        %564 = vmatprep.subr.mxu0 0.0
        %565 = vmatpush1.msra.mxu0 0.0
        %566 = vmatprep.subr.mxu0 0.0
        %567 = vmatpush1.msra.mxu0 0.0
        %568 = vmatprep.subr.mxu0 0.0
        %569 = vmatpush1.msra.mxu0 0.0
        %570 = vmatprep.subr.mxu0 0.0
        %571 = vmatpush1.msra.mxu0 0.0
        %572 = vmatprep.subr.mxu0 0.0
        %573 = vmatpush1.msra.mxu0 0.0
        %574 = vmatprep.subr.mxu0 0.0
        %575 = vmatpush1.msra.mxu0 0.0
        %576 = vmatprep.subr.mxu0 0.0
        %577 = vmatpush1.msra.mxu0 0.0
        %578 = vmatprep.subr.mxu0 0.0
        %579 = vmatpush1.msra.mxu0 0.0
        %580 = vmatprep.subr.mxu0 0.0
        %581 = vmatpush1.msra.mxu0 0.0
        %582 = vmatprep.subr.mxu0 0.0
        %583 = vmatpush1.msra.mxu0 0.0
        %584 = vmatprep.subr.mxu0 0.0
        %585 = vmatpush1.msra.mxu0 0.0
        %586 = vmatprep.subr.mxu0 0.0
        %587 = vmatpush1.msra.mxu0 0.0
        %588 = vmatprep.mubr.f32.mxu0 0.0
        %v589 = vand.u32 %v143, 4294901760
        %590 = vmatmul.mubr.f32.gmra.mrb[0].mxu0 %v589
        %v591 = vpop.f32.mrb[0].mxu0
        %v592 = vadd.f32 %v520, %v591
        %v593 = vpop.f32.mrb[0].mxu0
        %594 = vdwg.mxu0
        %v595 = vand.u32 2147483647, %v592
        %vm596 = vcmp.le.f32.partialorder %v595, 0.7853982
        %vm597 = vcmp.lt.s32.totalorder %v592, 0
        %v598 = vand.u32 %v592, 2139095040
        %v599 = vshrl.u32 %v598, 23
        %v600 = vsub.s32 %v599, 127
        %v601 = vand.u32 2147483647, %v592
        %v602 = vand.u32 %v601, 8388607
        %v603 = vor.u32 %v602, 8388608
        %v604 = vsub.s32 0, %v603
        %v605 = vadd.s32 %v600, 1
        %vm606 = vcmp.gt.s32.totalorder %v605, 0
        %v607 = vsel %vm606, %v605, 0
        %v608 = vshrl.u32 %v607, 5
        %v609 = vand.u32 %v607, 31
        %v610 = vsub.s32 32, %v609
        %v611 = vshrl.u32 683565275, %v610
        %v612 = vshll.u32 683565275, %v609
        %v613 = vshrl.u32 2475754826, %v610
        %v614 = vor.u32 %v612, %v613
        %v615 = vshll.u32 2475754826, %v609
        %v616 = vshrl.u32 2131351028, %v610
        %v617 = vor.u32 %v615, %v616
        %v618 = vshll.u32 2131351028, %v609
        %v619 = vshrl.u32 2102212464, %v610
        %v620 = vor.u32 %v618, %v619
        %v621 = vshll.u32 2102212464, %v609
        %v622 = vshrl.u32 920167782, %v610
        %v623 = vor.u32 %v621, %v622
        %v624 = vshll.u32 920167782, %v609
        %v625 = vshrl.u32 1326507024, %v610
        %v626 = vor.u32 %v624, %v625
        %vm627 = vcmp.lt.s32.totalorder %v608, 1
        %vm628 = vcmp.lt.s32.totalorder %v608, 2
        %vm629 = vcmp.lt.s32.totalorder %v608, 3
        %vm630 = vcmp.lt.s32.totalorder %v608, 4
        %v631 = vsel %vm627, %v611, %v614
        %v632 = vsel %vm630, %v620, 2102212464
        %v633 = vsel %vm629, %v617, %v632
        %v634 = vsel %vm628, %v631, %v633
        %v635 = vsel %vm627, %v614, %v617
        %v636 = vsel %vm630, %v623, 920167782
        %v637 = vsel %vm629, %v620, %v636
        %v638 = vsel %vm628, %v635, %v637
        %v639 = vsel %vm627, %v617, %v620
        %v640 = vsel %vm630, %v626, 1326507024
        %v641 = vsel %vm629, %v623, %v640
        %v642 = vsel %vm628, %v639, %v641
        %v643 = vshll.u32 %v603, 8
        %v644 = vmul.u32.u64.compose %v643, %v642
        %v645 = vextract.low.u32 %v644
        %v646 = vextract.high.u32 %v644
        %v647 = vmul.u32.u64.compose %v643, %v638
        %v648 = vextract.low.u32 %v647
        %v649 = vextract.high.u32 %v647
        %v650 = vmul.u32 %v643, %v634
        %v651 = vadd.s32 %v646, %v648
        %vm652 = vc.u32 %v646, %v648
        %v653 = vadd.s32 %v649, 1
        %v654 = vsel %vm652, %v653, %v649
        %v655 = vadd.s32 %v650, %v654
        %v656 = vadd.s32 %v655, 536870912
        %v657 = vshrl.u32 %v656, 30
        %v658 = vshll.u32 %v657, 30
        %v659 = vsub.s32 %v655, %v658
        %vm660 = vcmp.lt.s32.totalorder %v659, 0
        %v661 = vsub.s32 0, %v659
        %v662 = vsel %vm660, %v661, %v659
        %v663 = vclz %v662
        %v664 = vsub.s32 %v663, 2
        %vm665 = vcmp.gt.s32.totalorder 0, %v664
        %v666 = vsel %vm665, 0, %v664
        %v667 = vsub.s32 32, %v666
        %v668 = vshll.u32 %v659, %v666
        %v669 = vshrl.u32 %v651, %v667
        %v670 = vor.u32 %v668, %v669
        %v671 = vsub.s32 4294967266, %v666
        %v672 = vadd.s32 %v671, 127
        %v673 = vshll.u32 %v672, 23
        %v674 = vor.u32 4788187, %v673
        %v675 = vand.u32 2147483647, %v674
        %v677 = vcvt.s32.f32 %v670
        %v678 = vmul.f32 %v677, %v675
        %v679 = vxor.u32 %v678, 2147483648
        %v680 = vsel %vm597, %v679, %v678
        %v681 = vsub.s32 4, %v657
        %v682 = vsel %vm597, %v681, %v657
        %v683 = vsel %vm596, %v592, %v680
        %v684 = vsel %vm596, 0, %v682
        %v685 = vcosq.f32.pop %v683
        %v686 = vsinq.f32.pop %v683
        %vm687 = vweird.f32 %v592
        %v688 = vand.u32 %v684, 3
        %vm689 = vcmp.lt.s32.totalorder %v688, 2
        %vm690 = vcmp.eq.s32.totalorder %v688, 0
        %v691 = vxor.u32 %v686, 2147483648
        %v692 = vsel %vm690, %v685, %v691
        %vm693 = vcmp.eq.s32.totalorder %v688, 2
        %v694 = vxor.u32 %v685, 2147483648
        %v695 = vsel %vm693, %v694, %v686
        %v696 = vsel %vm689, %v692, %v695
        %v697 = vsel %vm687, nan, %v696
        %698 = vst [vmem:[%s134] sm:$0xff] %v697
        %v699 = vand.u32 2147483647, %v592
        %vm700 = vcmp.le.f32.partialorder %v699, 0.7853982
        %vm701 = vcmp.lt.s32.totalorder %v592, 0
        %v702 = vand.u32 %v592, 2139095040
        %v703 = vshrl.u32 %v702, 23
        %v704 = vsub.s32 %v703, 127
        %v705 = vand.u32 2147483647, %v592
        %v706 = vand.u32 %v705, 8388607
        %v707 = vor.u32 %v706, 8388608
        %v708 = vsub.s32 0, %v707
        %v709 = vadd.s32 %v704, 1
        %vm710 = vcmp.gt.s32.totalorder %v709, 0
        %v711 = vsel %vm710, %v709, 0
        %v712 = vshrl.u32 %v711, 5
        %v713 = vand.u32 %v711, 31
        %v714 = vsub.s32 32, %v713
        %v715 = vshrl.u32 683565275, %v714
        %v716 = vshll.u32 683565275, %v713
        %v717 = vshrl.u32 2475754826, %v714
        %v718 = vor.u32 %v716, %v717
        %v719 = vshll.u32 2475754826, %v713
        %v720 = vshrl.u32 2131351028, %v714
        %v721 = vor.u32 %v719, %v720
        %v722 = vshll.u32 2131351028, %v713
        %v723 = vshrl.u32 2102212464, %v714
        %v724 = vor.u32 %v722, %v723
        %v725 = vshll.u32 2102212464, %v713
        %v726 = vshrl.u32 920167782, %v714
        %v727 = vor.u32 %v725, %v726
        %v728 = vshll.u32 920167782, %v713
        %v729 = vshrl.u32 1326507024, %v714
        %v730 = vor.u32 %v728, %v729
        %vm731 = vcmp.lt.s32.totalorder %v712, 1
        %vm732 = vcmp.lt.s32.totalorder %v712, 2
        %vm733 = vcmp.lt.s32.totalorder %v712, 3
        %vm734 = vcmp.lt.s32.totalorder %v712, 4
        %v735 = vsel %vm731, %v715, %v718
        %v736 = vsel %vm734, %v724, 2102212464
        %v737 = vsel %vm733, %v721, %v736
        %v738 = vsel %vm732, %v735, %v737
        %v739 = vsel %vm731, %v718, %v721
        %v740 = vsel %vm734, %v727, 920167782
        %v741 = vsel %vm733, %v724, %v740
        %v742 = vsel %vm732, %v739, %v741
        %v743 = vsel %vm731, %v721, %v724
        %v744 = vsel %vm734, %v730, 1326507024
        %v745 = vsel %vm733, %v727, %v744
        %v746 = vsel %vm732, %v743, %v745
        %v747 = vshll.u32 %v707, 8
        %v748 = vmul.u32.u64.compose %v747, %v746
        %v749 = vextract.low.u32 %v748
        %v750 = vextract.high.u32 %v748
        %v751 = vmul.u32.u64.compose %v747, %v742
        %v752 = vextract.low.u32 %v751
        %v753 = vextract.high.u32 %v751
        %v754 = vmul.u32 %v747, %v738
        %v755 = vadd.s32 %v750, %v752
        %vm756 = vc.u32 %v750, %v752
        %v757 = vadd.s32 %v753, 1
        %v758 = vsel %vm756, %v757, %v753
        %v759 = vadd.s32 %v754, %v758
        %v760 = vadd.s32 %v759, 536870912
        %v761 = vshrl.u32 %v760, 30
        %v762 = vshll.u32 %v761, 30
        %v763 = vsub.s32 %v759, %v762
        %vm764 = vcmp.lt.s32.totalorder %v763, 0
        %v765 = vsub.s32 0, %v763
        %v766 = vsel %vm764, %v765, %v763
        %v767 = vclz %v766
        %v768 = vsub.s32 %v767, 2
        %vm769 = vcmp.gt.s32.totalorder 0, %v768
        %v770 = vsel %vm769, 0, %v768
        %v771 = vsub.s32 32, %v770
        %v772 = vshll.u32 %v763, %v770
        %v773 = vshrl.u32 %v755, %v771
        %v774 = vor.u32 %v772, %v773
        %v775 = vsub.s32 4294967266, %v770
        %v776 = vadd.s32 %v775, 127
        %v777 = vshll.u32 %v776, 23
        %v778 = vor.u32 4788187, %v777
        %v779 = vand.u32 2147483647, %v778
        %v781 = vcvt.s32.f32 %v774
        %v782 = vmul.f32 %v781, %v779
        %v783 = vxor.u32 %v782, 2147483648
        %v784 = vsel %vm701, %v783, %v782
        %v785 = vsub.s32 4, %v761
        %v786 = vsel %vm701, %v785, %v761
        %v787 = vsel %vm700, %v592, %v784
        %v788 = vsel %vm700, 0, %v786
        %v789 = vcosq.f32.pop %v787
        %v790 = vsinq.f32.pop %v787
        %vm791 = vweird.f32 %v592
        %v792 = vadd.s32 %v788, 3
        %v793 = vand.u32 %v792, 3
        %vm794 = vcmp.lt.s32.totalorder %v793, 2
        %vm795 = vcmp.eq.s32.totalorder %v793, 0
        %v796 = vxor.u32 %v790, 2147483648
        %v797 = vsel %vm795, %v789, %v796
        %vm798 = vcmp.eq.s32.totalorder %v793, 2
        %v799 = vxor.u32 %v789, 2147483648
        %v800 = vsel %vm798, %v799, %v790
        %v801 = vsel %vm794, %v797, %v800
        %v802 = vsel %vm791, nan, %v801
        %803 = vst [vmem:[%s134 + $0x8] sm:$0xff] %v802
        %s804 = sand.u32 %s71, 1
        %s805 = scalar_lea.sflag [#allocation3], %s804
        %s806 = sand.u32 %s71, 1
        %s807 = smul.addr %s806, 16
        %s808 = scalar_lea.vmem [#allocation2], %s807
        // Predicated region
        $region29: #{tpu_custom_call.1} parent=27 // pred_check
          %p809 = pneg %p81
        $region30: #{tpu_custom_call.1} parent=27 // pred_check_branch
          %811 = sbr.rel (%p809) target = $region32
        $region31: #{tpu_custom_call.1} parent=27 // pred_region
          %s813 = ssub.s32 256, 256
          %814 = vsyncadd %s805, %s813
          %s815 = smul.addr %s16, 2
          %s816 = smul.addr %s815, 128
          %s817 = scalar_lea.hbm %s2, %s816
          %s819 = sshll.u32 %s808, 4
          %s820 = int_to_ptr.vmem [resolvable:$true] %s819
          %822 = dma.vmem_to_hbm [thread:$0]  %s820, 256, %s817, %s805
        $region32: #{tpu_custom_call.1} parent=27 // pred_fallthru
          _
      $region28: #{tpu_custom_call.1} parent=5 // pred_fallthru
        _
      %p823 = scmp.le.s32.totalorder 2, %s11
      // Predicated region
      $region33: #{tpu_custom_call.1} parent=5 // pred_check
        %p824 = pneg %p823
      $region34: #{tpu_custom_call.1} parent=5 // pred_check_branch
        %826 = sbr.rel (%p824) target = $region36
      $region35: #{tpu_custom_call.1} parent=5 // pred_region
        %s827 = ssub.s32 %s11, 2
        // Predicated region
        $region37: #{tpu_custom_call.1} parent=35 // pred_check
          %p828 = pneg %p87
        $region38: #{tpu_custom_call.1} parent=35 // pred_check_branch
          %830 = sbr.rel (%p828) target = $region40
        $region39: #{tpu_custom_call.1} parent=35 // pred_region
          %s831 = sand.u32 %s72, 1
          %s832 = scalar_lea.sflag [#allocation3], %s831
          %s833 = sand.u32 %s72, 1
          %s834 = smul.addr %s833, 16
          %s835 = scalar_lea.vmem [#allocation2], %s834
          %836 = dma.done %s832, 256
        $region40: #{tpu_custom_call.1} parent=35 // pred_fallthru
          _
      $region36: #{tpu_custom_call.1} parent=5 // pred_fallthru
        _
    $region6: #{tpu_custom_call.1} parent=1 // loop_footer
      %s15 = sadd.s32 1, %s11
    $region7: #{tpu_custom_call.1} parent=1 // loop_footer_branch
      %10 = sbr.rel target = $region3
    $region8: #{tpu_custom_call.1} parent=1 // loop_exit
      _
    %837 = vsyncpa [#allocation3], 1
    %s838 = scalar_lea.sflag [#allocation3], 1
    %839 = vsyncpa %s838, 1

</llo_original>
